<compile_context>
chip_gen: v7x
topology: tpu7x:2x2x1
jax: 0.10.0
libtpu: 0.0.40
codegen_flags: <defaults>
</compile_context>

<pallas_src>
import functools
import numpy as np

import jax
import jax.numpy as jnp
from jax.experimental import pallas as pl
from jax.experimental.pallas import tpu as pltpu


def _round_up(x, m):
    return (x + m - 1) // m * m


_VMEM_LIMIT_CACHE = None


def _vmem_limit():
    """64 MiB on v5e/v6e (128 MiB physical), 32 MiB on v7x (64 MiB physical)."""
    global _VMEM_LIMIT_CACHE
    if _VMEM_LIMIT_CACHE is None:
        try:
            cap = int(pltpu.get_tpu_info().vmem_capacity_bytes)
        except Exception:
            cap = 64 * 1024 * 1024
        _VMEM_LIMIT_CACHE = max(32 * 1024 * 1024,
                                min(64 * 1024 * 1024, cap // 2))
    return _VMEM_LIMIT_CACHE


# -----------------------------------------------------------------------------
# Fused linear (+ optional activation), tiled over M (no host-side pad)
# -----------------------------------------------------------------------------
def _linear_kernel(x_ref, w_ref, b_ref, o_ref, *, activation):
    y = jnp.dot(x_ref[...], w_ref[...], preferred_element_type=jnp.float32)
    y = y + b_ref[...]
    if activation == "sigmoid":
        y = jax.nn.sigmoid(y)
    elif activation == "tanh":
        y = jnp.tanh(y)
    o_ref[...] = y.astype(o_ref.dtype)


def linear_pallas(x2d, w_t, b_row, activation="none",
                  out_dtype=jnp.float32, tm=512):
    """y = act(x2d @ w_t + b_row).  x2d: (M,K), w_t: (K,N) bf16, b_row: (1,N)."""
    m, k = x2d.shape
    n = w_t.shape[1]
    x2d = x2d.astype(jnp.bfloat16)            # bf16 MXU inputs, f32 accumulate
    if m <= tm:
        tm_eff = m                            # single full block (always legal)
    else:
        tm_eff = tm                           # 512: multiple of 256 and 8
    grid_m = pl.cdiv(m, tm_eff)               # ragged last block: OOB writes dropped
    kern = functools.partial(_linear_kernel, activation=activation)
    return pl.pallas_call(
        kern,
        out_shape=jax.ShapeDtypeStruct((m, n), out_dtype),
        grid=(grid_m,),
        in_specs=[
            pl.BlockSpec((tm_eff, k), lambda i: (i, 0)),
            pl.BlockSpec((k, n), lambda i: (0, 0)),
            pl.BlockSpec((1, n), lambda i: (0, 0)),
        ],
        out_specs=pl.BlockSpec((tm_eff, n), lambda i: (i, 0)),
        compiler_params=pltpu.CompilerParams(
            dimension_semantics=("parallel",),
            vmem_limit_bytes=_vmem_limit()),
    )(x2d, w_t.astype(jnp.bfloat16), b_row.astype(jnp.float32))


# -----------------------------------------------------------------------------
# Bidirectional LSTM recurrence:
#   grid = (direction, time-chunk); direction is "parallel" (v7x 2-TC split),
#   time-chunk is "arbitrary" (carried h/c scratch).  Backward-direction time
#   reversal lives entirely in the index_maps + reversed in-chunk offsets.
# -----------------------------------------------------------------------------
def _bilstm_kernel(gates_f_ref, gates_b_ref, mask_ref, whh_f_ref, whh_b_ref,
                   o_ref, h_scr, c_scr, *, tc, hid):
    is_fwd = pl.program_id(0) == 0

    @pl.when(pl.program_id(1) == 0)
    def _():
        h_scr[...] = jnp.zeros_like(h_scr)
        c_scr[...] = jnp.zeros_like(c_scr)

    # one fused (H, 4H) recurrent weight per direction, bf16
    whh = jnp.where(is_fwd, whh_f_ref[...], whh_b_ref[...])

    @pl.loop(0, tc)
    def _(s):
        off = jnp.where(is_fwd, s, tc - 1 - s)          # in-chunk time offset
        g = jnp.where(is_fwd, gates_f_ref[off], gates_b_ref[off])   # (B, 4H) bf16
        m = mask_ref[off]                                            # (B, 1) f32
        h_prev = h_scr[...]
        c_prev = c_scr[...]
        pre = g.astype(jnp.float32) + jnp.dot(
            h_prev.astype(jnp.bfloat16), whh,
            preferred_element_type=jnp.float32)                      # (B, 4H)
        i_g = jax.nn.sigmoid(pre[:, 0 * hid:1 * hid])
        f_g = jax.nn.sigmoid(pre[:, 1 * hid:2 * hid])
        g_g = jnp.tanh(pre[:, 2 * hid:3 * hid])
        o_g = jax.nn.sigmoid(pre[:, 3 * hid:4 * hid])
        c_new = f_g * c_prev + i_g * g_g
        h_new = o_g * jnp.tanh(c_new)
        # pack_padded semantics: freeze state & emit zeros past the length
        h_scr[...] = m * h_new + (1.0 - m) * h_prev
        c_scr[...] = m * c_new + (1.0 - m) * c_prev
        o_ref[off] = (m * h_new).astype(o_ref.dtype)


def bidir_lstm(x, lengths, params, tc=64):
    """x: (B, T, In) -> (B, T, 2H). Padded positions produce zeros."""
    x = x.astype(jnp.float32)
    batch, t_steps, in_dim = x.shape
    hid = params["hid"]
    tc = max(1, min(tc, t_steps))
    t_pad = _round_up(t_steps, tc)
    nc = t_pad // tc

    # time-major input, padded so every chunk is full (mask covers padding)
    x_tm = jnp.transpose(x, (1, 0, 2)).reshape(t_steps * batch, in_dim)
    if t_pad != t_steps:
        x_tm = jnp.pad(x_tm, ((0, (t_pad - t_steps) * batch), (0, 0)))

    # per-direction input projections, lane-dense N = 4H, stored in bf16
    gates_f = linear_pallas(x_tm, params["wih_f_t"], params["bias_f"],
                            out_dtype=jnp.bfloat16
                            ).reshape(t_pad, batch, 4 * hid)
    gates_b = linear_pallas(x_tm, params["wih_b_t"], params["bias_b"],
                            out_dtype=jnp.bfloat16
                            ).reshape(t_pad, batch, 4 * hid)

    mask = (jnp.arange(t_pad)[:, None] < lengths[None, :]
            ).astype(jnp.float32)[:, :, None]                       # (T_pad, B, 1)

    kern = functools.partial(_bilstm_kernel, tc=tc, hid=hid)
    out = pl.pallas_call(
        kern,
        out_shape=jax.ShapeDtypeStruct((2, t_pad, batch, hid), jnp.float32),
        grid=(2, nc),
        in_specs=[
            # forward gates: chunk c when d==0; pinned (no refetch) when d==1
            pl.BlockSpec((tc, batch, 4 * hid), lambda d, c: (c * (1 - d), 0, 0)),
            # backward gates: chunk nc-1-c when d==1; pinned when d==0
            pl.BlockSpec((tc, batch, 4 * hid),
                         lambda d, c: ((nc - 1 - c) * d, 0, 0)),
            # mask follows the active direction's chunk
            pl.BlockSpec((tc, batch, 1),
                         lambda d, c: (c + d * (nc - 1 - 2 * c), 0, 0)),
            pl.BlockSpec((hid, 4 * hid), lambda d, c: (0, 0)),
            pl.BlockSpec((hid, 4 * hid), lambda d, c: (0, 0)),
        ],
        out_specs=pl.BlockSpec((None, tc, batch, hid),
                               lambda d, c: (d, c + d * (nc - 1 - 2 * c), 0, 0)),
        scratch_shapes=[pltpu.VMEM((batch, hid), jnp.float32),
                        pltpu.VMEM((batch, hid), jnp.float32)],
        compiler_params=pltpu.CompilerParams(
            dimension_semantics=("parallel", "arbitrary"),
            vmem_limit_bytes=_vmem_limit()),
    )(gates_f, gates_b, mask, params["whh_f_t"], params["whh_b_t"])

    h_f = out[0, :t_steps]                                           # (T, B, H)
    h_b = out[1, :t_steps]                                           # (T, B, H)
    return jnp.transpose(jnp.concatenate([h_f, h_b], axis=-1), (1, 0, 2))


# -----------------------------------------------------------------------------
# ContextAttention group pooling: fused attention linear, per-head softmax,
# MXU weighted reduction, optional group-axis tiling.
# -----------------------------------------------------------------------------
def _group_attn_kernel(x_ref, w_ref, b_ref, ctx_ref, mask_ref, o_ref,
                       *, nhead, hsize):
    x = x_ref[0]                                                     # (L, D) f32
    att = jnp.tanh(
        jnp.dot(x.astype(jnp.bfloat16), w_ref[...],
                preferred_element_type=jnp.float32) + b_ref[...])    # (L, D)
    sim = jnp.dot(att, ctx_ref[...],
                  preferred_element_type=jnp.float32)                # (L, NH)
    mask = mask_ref[0]                                               # (L, Gt)
    m3 = mask[:, :, None]                                            # (L, Gt, 1)
    logits = jnp.where(m3 > 0.0, sim[:, None, :], -1e10)             # (L, Gt, NH)
    mx = jnp.max(logits, axis=0, keepdims=True)
    e = jnp.exp(logits - mx)
    denom = jnp.sum(e, axis=0, keepdims=True)
    # empty groups: all-masked column -> weights exactly 0 (keep -1e10 & *m3)
    w = e * pl.reciprocal(denom, approx=True) * m3                   # (L, Gt, NH)
    parts = []
    for h in range(nhead):
        parts.append(jax.lax.dot_general(
            w[:, :, h], x[:, h * hsize:(h + 1) * hsize],
            (((0,), (0,)), ((), ())),
            preferred_element_type=jnp.float32))                     # (Gt, hs)
    o_ref[0] = jnp.concatenate(parts, axis=-1).astype(o_ref.dtype)   # (Gt, D)


def group_attention_pallas(x, attn, mask):
    batch, seq_len, dim = x.shape
    n_groups = mask.shape[2]
    nhead = attn["nhead"]
    hsize = dim // nhead
    gt = n_groups if n_groups <= 512 else 512          # bound VMEM for long scores
    ng = pl.cdiv(n_groups, gt)
    kern = functools.partial(_group_attn_kernel, nhead=nhead, hsize=hsize)
    return pl.pallas_call(
        kern,
        grid=(batch, ng),
        out_shape=jax.ShapeDtypeStruct((batch, n_groups, dim), jnp.float32),
        in_specs=[
            pl.BlockSpec((1, seq_len, dim), lambda b, g: (b, 0, 0)),
            pl.BlockSpec((dim, dim), lambda b, g: (0, 0)),
            pl.BlockSpec((1, dim), lambda b, g: (0, 0)),
            pl.BlockSpec((dim, nhead), lambda b, g: (0, 0)),
            pl.BlockSpec((1, seq_len, gt), lambda b, g: (b, 0, g)),
        ],
        out_specs=pl.BlockSpec((1, gt, dim), lambda b, g: (b, g, 0)),
        compiler_params=pltpu.CompilerParams(
            dimension_semantics=("parallel", "parallel"),
            vmem_limit_bytes=_vmem_limit()),
    )(x.astype(jnp.float32), attn["w_t"].astype(jnp.bfloat16),
      attn["b"].astype(jnp.float32), attn["ctx"].astype(jnp.float32),
      mask.astype(jnp.float32))


def make_higher_node(lower_out, attn, group_idx_np, num_groups_np, valid_len_np):
    batch, seq_len, dim = lower_out.shape
    n_groups = int(np.max(num_groups_np))
    gi = jnp.asarray(np.asarray(group_idx_np)[:, :seq_len], jnp.int32)   # (B, L)
    vl = jnp.asarray(np.asarray(valid_len_np), jnp.int32)
    valid = jnp.arange(seq_len)[None, :] < vl[:, None]                   # (B, L)
    mask = ((gi[:, :, None] == jnp.arange(n_groups)[None, None, :])
            & valid[:, :, None]).astype(jnp.float32)                     # (B, L, G)
    return group_attention_pallas(lower_out, attn, mask)


# -----------------------------------------------------------------------------
# Voice net: all voices stacked into one bidirectional LSTM call
# -----------------------------------------------------------------------------
def run_voice_net(x, voice_numbers_np, voice_params):
    # TODO(synk): host-side index bookkeeping; precompute static-shaped tables
    # offline for production to avoid retracing per input.
    batch, num_notes, feat = x.shape
    vsize = voice_params["hid"]
    max_voice = int(voice_numbers_np.max())
    if max_voice < 1:
        return jnp.zeros((batch, num_notes, 2 * vsize), jnp.float32)

    counts = np.stack([(voice_numbers_np == v + 1).sum(axis=1)
                       for v in range(max_voice)], axis=1).astype(np.int32)
    maxlen = max(int(counts.max()), 1)
    gather_idx = np.zeros((batch, max_voice, maxlen), np.int32)
    for b in range(batch):
        for v in range(max_voice):
            idxs = np.nonzero(voice_numbers_np[b] == v + 1)[0]
            gather_idx[b, v, :len(idxs)] = idxs

    gi = jnp.asarray(gather_idx.reshape(batch, max_voice * maxlen))
    vx = jnp.take_along_axis(x, gi[:, :, None], axis=1)
    vx = vx.reshape(batch * max_voice, maxlen, feat)
    vlen = jnp.asarray(counts.reshape(-1), jnp.int32)

    vout = bidir_lstm(vx, vlen, voice_params)            # padded steps -> zeros
    vout = vout.reshape(batch, max_voice * maxlen, 2 * vsize)

    out = jnp.zeros((batch, num_notes, 2 * vsize), jnp.float32)
    return out.at[jnp.arange(batch)[:, None], gi].add(vout)   # single scatter-add


# -----------------------------------------------------------------------------
# Beat / measure group bookkeeping (host-side, small)
# -----------------------------------------------------------------------------
def compute_groups(note_locations, lengths_np):
    beat = np.asarray(note_locations["beat"])
    measure = np.asarray(note_locations["measure"])
    batch = beat.shape[0]
    beat_grp = (beat - beat[:, :1]).astype(np.int32)
    meas_grp = (measure - measure[:, :1]).astype(np.int32)
    nbeats = np.array([beat_grp[b, lengths_np[b] - 1] + 1 for b in range(batch)],
                      np.int32)
    nmeas = np.array([meas_grp[b, lengths_np[b] - 1] + 1 for b in range(batch)],
                     np.int32)
    gb = int(nbeats.max())
    meas_of_beat = np.zeros((batch, gb), np.int32)
    for b in range(batch):
        n = int(lengths_np[b])
        # reversed assignment -> first occurrence per beat group wins
        meas_of_beat[b, beat_grp[b, :n][::-1]] = meas_grp[b, :n][::-1]
    return beat_grp, nbeats, meas_grp, nmeas, meas_of_beat


# -----------------------------------------------------------------------------
# Parameters (deterministic synthetic init)
# -----------------------------------------------------------------------------
def _uniform(key, shape, bound):
    return jax.random.uniform(key, shape, jnp.float32, -bound, bound)


def make_linear_params(key, in_f, out_f):
    k1, k2 = jax.random.split(key)
    bound = 1.0 / np.sqrt(in_f)
    w = _uniform(k1, (out_f, in_f), bound)
    b = _uniform(k2, (out_f,), bound)
    return {"w_t": jnp.transpose(w).astype(jnp.bfloat16), "b": b[None, :]}


def _make_lstm_dir(key, in_f, hid):
    ks = jax.random.split(key, 4)
    bound = 1.0 / np.sqrt(hid)
    wih = _uniform(ks[0], (4 * hid, in_f), bound)   # gate order i, f, g, o
    whh = _uniform(ks[1], (4 * hid, hid), bound)
    bih = _uniform(ks[2], (4 * hid,), bound)
    bhh = _uniform(ks[3], (4 * hid,), bound)
    return wih, whh, bih + bhh


def make_bilstm_params(key, in_f, hid):
    kf, kb = jax.random.split(key)
    wih_f, whh_f, b_f = _make_lstm_dir(kf, in_f, hid)
    wih_b, whh_b, b_b = _make_lstm_dir(kb, in_f, hid)
    return {
        "wih_f_t": jnp.transpose(wih_f).astype(jnp.bfloat16),   # (In, 4H)
        "wih_b_t": jnp.transpose(wih_b).astype(jnp.bfloat16),
        "bias_f": b_f[None, :],
        "bias_b": b_b[None, :],
        "whh_f_t": jnp.transpose(whh_f).astype(jnp.bfloat16),   # (H, 4H) fused
        "whh_b_t": jnp.transpose(whh_b).astype(jnp.bfloat16),
        "hid": int(hid),
    }


def make_attention_params(key, size, num_head):
    k1, k2 = jax.random.split(key)
    lin = make_linear_params(k1, size, size)
    hs = size // num_head
    ctx = jax.random.uniform(k2, (num_head, hs), jnp.float32, -1.0, 1.0)
    ctx_mat = jnp.zeros((size, num_head), jnp.float32)   # block-sparse (D, NH)
    for h in range(num_head):
        ctx_mat = ctx_mat.at[h * hs:(h + 1) * hs, h].set(ctx[h])
    return {"w_t": lin["w_t"], "b": lin["b"], "ctx": ctx_mat,
            "nhead": int(num_head)}


def make_virtuoso_params(key, input_size, bert_hidden, embedding_size, net_params):
    ks = jax.random.split(key, 8)
    note, voice = net_params["note_size"], net_params["voice_size"]
    beat, measure = net_params["beat_size"], net_params["measure_size"]
    nhead = net_params["num_attention_head"]
    return {
        "linear": make_linear_params(ks[0], input_size, embedding_size),
        "proj": make_linear_params(ks[1], embedding_size + bert_hidden, note),
        "note_lstm": make_bilstm_params(ks[2], note, note),
        "voice_lstm": make_bilstm_params(ks[3], note, voice),
        "beat_attn": make_attention_params(ks[4], (note + voice) * 2, nhead),
        "beat_lstm": make_bilstm_params(ks[5], (note + voice) * 2, beat),
        "measure_attn": make_attention_params(ks[6], beat * 2, nhead),
        "measure_lstm": make_bilstm_params(ks[7], beat * 2, measure),
    }


# -----------------------------------------------------------------------------
# Full forward
# -----------------------------------------------------------------------------
def virtuoso_forward(params, bert_output, virtuoso_input, note_locations, lengths_np):
    batch, num_notes, _ = virtuoso_input.shape
    lengths_j = jnp.asarray(lengths_np, jnp.int32)

    v = linear_pallas(virtuoso_input.reshape(batch * num_notes, -1),
                      params["linear"]["w_t"], params["linear"]["b"],
                      activation="sigmoid").reshape(batch, num_notes, -1)
    # TODO(synk): found_addon_idxs re-indexing path not implemented (None path only).
    x = jnp.concatenate([bert_output.astype(jnp.float32), v], axis=-1)
    x_emb = linear_pallas(x.reshape(batch * num_notes, -1),
                          params["proj"]["w_t"], params["proj"]["b"]
                          ).reshape(batch, num_notes, -1)

    # --- HanEncoderNoteLSTM ---
    # TODO(synk): single LSTM layer assumed (note/voice/beat/measure layer == 1).
    note_out = bidir_lstm(x_emb, lengths_j, params["note_lstm"])
    voice_out = run_voice_net(x_emb, np.asarray(note_locations["voice"]),
                              params["voice_lstm"])
    hidden_out = jnp.concatenate([note_out, voice_out], axis=-1)

    beat_grp, nbeats, meas_grp, nmeas, meas_of_beat = compute_groups(
        note_locations, np.asarray(lengths_np))
    beat_nodes = make_higher_node(hidden_out, params["beat_attn"],
                                  beat_grp, nbeats, np.asarray(lengths_np))
    beat_hidden = bidir_lstm(beat_nodes, jnp.asarray(nbeats, jnp.int32),
                             params["beat_lstm"])
    measure_nodes = make_higher_node(beat_hidden, params["measure_attn"],
                                     meas_of_beat, nmeas, nbeats)
    measure_hidden = bidir_lstm(measure_nodes, jnp.asarray(nmeas, jnp.int32),
                                params["measure_lstm"])

    gb, gm = beat_hidden.shape[1], measure_hidden.shape[1]
    beat_idx = jnp.asarray(np.clip(beat_grp, 0, gb - 1))
    meas_idx = jnp.asarray(np.clip(meas_grp, 0, gm - 1))
    beat_spanned = jnp.take_along_axis(beat_hidden, beat_idx[:, :, None], axis=1)
    measure_spanned = jnp.take_along_axis(measure_hidden, meas_idx[:, :, None], axis=1)
    total = jnp.concatenate([hidden_out, beat_spanned, measure_spanned], axis=-1)
    return {"note": note_out, "voice": hidden_out, "beat": beat_hidden,
            "measure": measure_hidden, "beat_spanned": beat_spanned,
            "measure_spanned": measure_spanned, "total_note_cat": total}


# -----------------------------------------------------------------------------
if __name__ == "__main__":
    B, N = 2, 16
    input_size = 10
    bert_hidden = 32
    embedding_size = 16
    net_params = dict(note_size=16, note_layer=1, voice_size=8, voice_layer=1,
                      beat_size=16, beat_layer=1, measure_size=16, measure_layer=1,
                      num_attention_head=4, drop_out=0.0)

    key = jax.random.PRNGKey(0)
    k_param, k_bert, k_virt = jax.random.split(key, 3)
    params = make_virtuoso_params(k_param, input_size, bert_hidden,
                                  embedding_size, net_params)

    bert_output = jax.random.normal(k_bert, (B, N, bert_hidden), jnp.float32)
    virtuoso_input = jax.random.normal(k_virt, (B, N, input_size), jnp.float32)

    lengths = np.array([16, 12], np.int32)
    voice = np.array([[1, 2, 1, 2, 1, 2, 1, 1, 2, 1, 2, 1, 2, 1, 1, 2],
                      [1, 1, 2, 1, 2, 1, 1, 2, 1, 2, 1, 1, 0, 0, 0, 0]], np.int32)
    beat = np.array([[0, 0, 1, 1, 2, 2, 3, 3, 4, 4, 5, 5, 6, 6, 7, 7],
                     [0, 0, 0, 1, 1, 1, 2, 2, 2, 3, 3, 3, 3, 3, 3, 3]], np.int32)
    measure = np.array([[0, 0, 0, 0, 1, 1, 1, 1, 2, 2, 2, 2, 3, 3, 3, 3],
                        [0, 0, 0, 0, 0, 0, 1, 1, 1, 1, 1, 1, 1, 1, 1, 1]], np.int32)
    note_locations = {"voice": voice, "beat": beat, "measure": measure}

    out = virtuoso_forward(params, bert_output, virtuoso_input,
                           note_locations, lengths)
    total = jax.block_until_ready(out["total_note_cat"])
    assert total.shape == (B, N, (16 + 8) * 2 + 2 * 16 + 2 * 16)
    assert bool(jnp.all(jnp.isfinite(total)))
    print("KERNEL_OK")
</pallas_src>

<mosaic_0001>
module attributes {stable_mosaic.version = 11 : i64} {
  func.func @_linear_kernel(%arg0: i32, %arg1: memref<32x10xbf16, #tpu.memory_space<vmem>>, %arg2: memref<10x16xbf16, #tpu.memory_space<vmem>>, %arg3: memref<1x16xf32, #tpu.memory_space<vmem>>, %arg4: memref<32x16xf32, #tpu.memory_space<vmem>>) attributes {dimension_semantics = [#tpu.dimension_semantics<parallel>], iteration_bounds = array<i64: 1>, scalar_prefetch = 0 : i64, scratch_operands = 0 : i64, tpu.core_type = #tpu.core_type<tc>, window_params = [{transform_indices = @transform_0, window_bounds = array<i64: 32, 10>}, {pipeline_mode = #tpu.pipeline_mode<synchronous>, transform_indices = @transform_1, window_bounds = array<i64: 10, 16>}, {pipeline_mode = #tpu.pipeline_mode<synchronous>, transform_indices = @transform_2, window_bounds = array<i64: 1, 16>}, {transform_indices = @transform_3, window_bounds = array<i64: 32, 16>}]} {
    %c0 = arith.constant 0 : index
    %c0_0 = arith.constant 0 : index
    %0 = vector.load %arg1[%c0, %c0_0] : memref<32x10xbf16, #tpu.memory_space<vmem>>, vector<32x10xbf16>
    %c0_1 = arith.constant 0 : index
    %c0_2 = arith.constant 0 : index
    %1 = vector.load %arg2[%c0_1, %c0_2] : memref<10x16xbf16, #tpu.memory_space<vmem>>, vector<10x16xbf16>
    %cst = arith.constant dense<0.000000e+00> : vector<32x16xf32>
    %2 = tpu.matmul %0, %1, %cst {dimension_numbers = #tpu.dot_dimension_numbers<[1], [0], [0], [1], [0, 0, 1, 1], [], []>} : vector<32x10xbf16>, vector<10x16xbf16>, vector<32x16xf32> -> vector<32x16xf32>
    %c0_3 = arith.constant 0 : index
    %c0_4 = arith.constant 0 : index
    %3 = vector.load %arg3[%c0_3, %c0_4] : memref<1x16xf32, #tpu.memory_space<vmem>>, vector<1x16xf32>
    %4 = vector.broadcast %3 : vector<1x16xf32> to vector<32x16xf32>
    %5 = arith.addf %2, %4 : vector<32x16xf32>
    %6 = arith.negf %5 : vector<32x16xf32>
    %7 = math.exp %6 : vector<32x16xf32>
    %cst_5 = arith.constant 1.000000e+00 : f32
    %8 = vector.broadcast %cst_5 : f32 to vector<32x16xf32>
    %9 = arith.addf %8, %7 : vector<32x16xf32>
    %10 = arith.divf %8, %9 : vector<32x16xf32>
    %c0_6 = arith.constant 0 : index
    %c0_7 = arith.constant 0 : index
    %11 = vector.load %arg4[%c0_6, %c0_7] : memref<32x16xf32, #tpu.memory_space<vmem>>, vector<32x16xf32>
    tpu.vector_store %arg4[%c0_6, %c0_7], %10 {strides = array<i32>} : memref<32x16xf32, #tpu.memory_space<vmem>>, vector<32x16xf32>,
    return
  }
  func.func @transform_0(%arg0: i32) -> (i32, i32) {
    %c0_i32 = arith.constant 0 : i32
    %c0_i32_0 = arith.constant 0 : i32
    return %arg0, %c0_i32 : i32, i32
  }
  func.func @transform_1(%arg0: i32) -> (i32, i32) {
    %c0_i32 = arith.constant 0 : i32
    %c0_i32_0 = arith.constant 0 : i32
    %c0_i32_1 = arith.constant 0 : i32
    return %c0_i32, %c0_i32_0 : i32, i32
  }
  func.func @transform_2(%arg0: i32) -> (i32, i32) {
    %c0_i32 = arith.constant 0 : i32
    %c0_i32_0 = arith.constant 0 : i32
    %c0_i32_1 = arith.constant 0 : i32
    return %c0_i32, %c0_i32_0 : i32, i32
  }
  func.func @transform_3(%arg0: i32) -> (i32, i32) {
    %c0_i32 = arith.constant 0 : i32
    %c0_i32_0 = arith.constant 0 : i32
    return %arg0, %c0_i32 : i32, i32
  }
}

</mosaic_0001>

<llo_original>
// kernel: tpu_custom_call.1
$region0: #{tpu_custom_call.1}
  #allocation0 [shape = 'u32[]', space=smem, size = 0x4, offset = 0x4, fixed_abs, tag = 'smem constant byte address 0x4 - core index']
  #allocation1 [shape = 'u32[144,128]{1,0:T(1,128)}', space=vmem, size = 0x12000, scoped, tag = 'internal scratch']
  %s0 = inlined_call_operand.vmem [shape: bf16[32,10], index: 0, kind: input, shape index: {}]
  %s1 = inlined_call_operand.vmem [shape: bf16[10,16], index: 1, kind: input, shape index: {}]
  %s2 = inlined_call_operand.vmem [shape: f32[1,16], index: 2, kind: input, shape index: {}]
  %s3 = inlined_call_operand.vmem [shape: f32[32,16], index: 3, kind: output, shape index: {}]
  %s4 = sld [smem:[#allocation0]]
  $region22: #{tpu_custom_call.1} parent=0
    _
  %s6 = ssub.s32 1, %s4
  %s7 = scalar_select 0, %s6, %s4
  // Predicated region
  $region2: #{tpu_custom_call.1} parent=0 // pred_check
    _
  $region3: #{tpu_custom_call.1} parent=0 // pred_check_branch
    %9 = sbr.rel (0) target = $region5
  $region4: #{tpu_custom_call.1} parent=0 // pred_region
    _
  $region5: #{tpu_custom_call.1} parent=0 // pred_fallthru
    _
  // Predicated region
  $region6: #{tpu_custom_call.1} parent=0 // pred_check
    _
  $region7: #{tpu_custom_call.1} parent=0 // pred_check_branch
    %11 = sbr.rel (0) target = $region9
  $region8: #{tpu_custom_call.1} parent=0 // pred_region
    _
  $region9: #{tpu_custom_call.1} parent=0 // pred_fallthru
    _
  // Predicated region
  $region10: #{tpu_custom_call.1} parent=0 // pred_check
    _
  $region11: #{tpu_custom_call.1} parent=0 // pred_check_branch
    %13 = sbr.rel (0) target = $region13
  $region12: #{tpu_custom_call.1} parent=0 // pred_region
    _
  $region13: #{tpu_custom_call.1} parent=0 // pred_fallthru
    _
  %v15 = vld [vmem:[%s0] sm:$0xf]
  %v16 = vld [vmem:[%s0 + $0x4] sm:$0xf]
  %v17 = vld [vmem:[%s0 + $0x8] sm:$0xf]
  %v18 = vld [vmem:[%s0 + $0xc] sm:$0xf]
  %v19 = vld [vmem:[%s1] sm:$0xf]
  %v20 = vld [vmem:[%s1 + $0x4] sm:$0x1]
  %v21 = vld [vmem:[%s2] sm:$0x1]
  %v23 = vlaneseq
  %v24 = vshrl.u32 %v23, 7
  %v25 = vsub.s32 0, %v24
  %v26 = vrot.slane %v21, %v25
  %v32 = vunpack.c.l.b16 %v15
  %v33 = vunpack.c.l.b16 %v16
  %v34 = vunpack.c.l.b16 %v17
  %v35 = vunpack.c.l.b16 %v18
  %v36 = vpack.c.b16 %v33, %v32
  %v37 = vpack.c.b16 %v35, %v34
  %v40 = vunpack.c.l.b16 %v19
  %v41 = vunpack.c.l.b16 %v20
  %v42 = vpack.c.b16 %v41, %v40
  %vm43 = vcmask 80896
  %v45 = vsel %vm43, %v36, 0
  %v48 = vsel %vm43, %v37, 0
  %vm50 = vcmask 1044480
  %v52 = vsel %vm50, %v42, 0
  %54 = vmatprep.subr.bf16.mxu0 0
  %55 = vmatpush1.bf16.msra.mxu0 %v52
  %56 = vmatprep.subr.bf16.mxu0 0
  %57 = vmatpush1.bf16.msra.mxu0 0
  %58 = vmatprep.subr.bf16.mxu0 0
  %59 = vmatpush1.bf16.msra.mxu0 0
  %60 = vmatprep.subr.bf16.mxu0 0
  %61 = vmatpush1.bf16.msra.mxu0 0
  %62 = vmatprep.subr.bf16.mxu0 0
  %63 = vmatpush1.bf16.msra.mxu0 0
  %64 = vmatprep.subr.bf16.mxu0 0
  %65 = vmatpush1.bf16.msra.mxu0 0
  %66 = vmatprep.subr.bf16.mxu0 0
  %67 = vmatpush1.bf16.msra.mxu0 0
  %68 = vmatprep.subr.bf16.mxu0 0
  %69 = vmatpush1.bf16.msra.mxu0 0
  %70 = vmatprep.subr.bf16.mxu0 0
  %71 = vmatpush1.bf16.msra.mxu0 0
  %72 = vmatprep.subr.bf16.mxu0 0
  %73 = vmatpush1.bf16.msra.mxu0 0
  %74 = vmatprep.subr.bf16.mxu0 0
  %75 = vmatpush1.bf16.msra.mxu0 0
  %76 = vmatprep.subr.bf16.mxu0 0
  %77 = vmatpush1.bf16.msra.mxu0 0
  %78 = vmatprep.subr.bf16.mxu0 0
  %79 = vmatpush1.bf16.msra.mxu0 0
  %80 = vmatprep.subr.bf16.mxu0 0
  %81 = vmatpush1.bf16.msra.mxu0 0
  %82 = vmatprep.subr.bf16.mxu0 0
  %83 = vmatpush1.bf16.msra.mxu0 0
  %84 = vmatprep.subr.bf16.mxu0 0
  %85 = vmatpush1.bf16.msra.mxu0 0
  %86 = vmatprep.mubr.bf16.mxu0 0
  %87 = vmatmul.mubr.bf16.gmra.mrb[0].mxu0 %v45
  %v88 = vpop.f32.mrb[0].mxu0
  %v89 = vadd.f32 %v26, %v88
  %v90 = vpop.f32.mrb[0].mxu0
  %v91 = vpop.f32.mrb[0].mxu0
  %v92 = vadd.f32 %v26, %v91
  %v93 = vpop.f32.mrb[0].mxu0
  %94 = vmatprep.mubr.bf16.mxu0 0
  %95 = vmatmul.mubr.bf16.gmra.mrb[0].mxu0 %v48
  %v96 = vpop.f32.mrb[0].mxu0
  %v97 = vadd.f32 %v26, %v96
  %v98 = vpop.f32.mrb[0].mxu0
  %v99 = vpop.f32.mrb[0].mxu0
  %v100 = vadd.f32 %v26, %v99
  %v101 = vpop.f32.mrb[0].mxu0
  %102 = vdwg.mxu0
  %v103 = vxor.u32 %v89, 2147483648
  %v104 = vxor.u32 %v92, 2147483648
  %v105 = vxor.u32 %v97, 2147483648
  %v106 = vxor.u32 %v100, 2147483648
  %v107 = vmul.f32 %v103, 1.442695
  %v108 = vpow.pop %v107
  %v109 = vmul.f32 %v104, 1.442695
  %v110 = vpow.pop %v109
  %v111 = vmul.f32 %v105, 1.442695
  %v112 = vpow.pop %v111
  %v113 = vmul.f32 %v106, 1.442695
  %v114 = vpow.pop %v113
  %v115 = vadd.f32 %v108, 1.0
  %v116 = vadd.f32 %v110, 1.0
  %v117 = vadd.f32 %v112, 1.0
  %v118 = vadd.f32 %v114, 1.0
  %v119 = vrcp.pop %v115
  %v120 = vmul.f32 1.0, %v119
  %v121 = vrcp.pop %v116
  %v122 = vmul.f32 1.0, %v121
  %v123 = vrcp.pop %v117
  %v124 = vmul.f32 1.0, %v123
  %v125 = vrcp.pop %v118
  %v126 = vmul.f32 1.0, %v125
  %vm127 = vcmask 130048
  %128 = vst.msk [vmem:[%s3] sm:$0xff] %vm127, %v120
  %129 = vst.msk [vmem:[%s3 + $0x8] sm:$0xff] %vm127, %v122
  %130 = vst.msk [vmem:[%s3 + $0x10] sm:$0xff] %vm127, %v124
  %131 = vst.msk [vmem:[%s3 + $0x18] sm:$0xff] %vm127, %v126
  // Predicated region
  $region14: #{tpu_custom_call.1} parent=0 // pred_check
    _
  $region15: #{tpu_custom_call.1} parent=0 // pred_check_branch
    %133 = sbr.rel (0) target = $region17
  $region16: #{tpu_custom_call.1} parent=0 // pred_region
    _
  $region17: #{tpu_custom_call.1} parent=0 // pred_fallthru
    _
  // Predicated region
  $region18: #{tpu_custom_call.1} parent=0 // pred_check
    _
  $region19: #{tpu_custom_call.1} parent=0 // pred_check_branch
    %135 = sbr.rel (0) target = $region21
  $region20: #{tpu_custom_call.1} parent=0 // pred_region
    _
  $region21: #{tpu_custom_call.1} parent=0 // pred_fallthru
    _

</llo_original>
